<compile_context>
chip_gen: v6e
topology: v6e:2x2x1
jax: 0.10.0
libtpu: 0.0.40
codegen_flags: <defaults>
</compile_context>

<pallas_src>
import numpy as np
import jax
import jax.numpy as jnp
from jax import lax
from jax.experimental import pallas as pl
from jax.experimental.pallas import tpu as pltpu


def _round_up(x, m):
    return ((x + m - 1) // m) * m


# ---------------------------------------------------------------------------
# host-side glue: replicate pad_users_history_items (data-dependent loops)
# ---------------------------------------------------------------------------
def pad_users_history_items(batch_user_id, users_history_items):
    batch_user_id = np.asarray(batch_user_id)
    uhi = np.asarray(users_history_items)
    id_lists = []
    for row in uhi[batch_user_id]:
        lst = []
        for item_id in np.nonzero(row)[0]:
            lst += [int(item_id)] * int(row[item_id])
        id_lists.append(lst)
    lengths = np.asarray([len(l) for l in id_lists], dtype=np.int32)
    max_len = int(lengths.max())
    # Pad the history length to a multiple of 16 (bf16 sublane packing) so the
    # in-kernel (TB, N, F) -> (TB*N, F) reshape is layout-free. Extra positions
    # are masked (softmax weight exactly 0) => identical result to PyTorch.
    padded_len = max(16, _round_up(max_len, 16))
    ids = np.full((len(id_lists), padded_len), -1, dtype=np.int32)
    for i, l in enumerate(id_lists):
        ids[i, : len(l)] = l
    return lengths, ids


# ---------------------------------------------------------------------------
# Pallas kernel: one (batch tile, item tile) block per grid step
# ---------------------------------------------------------------------------
def _make_kernel(user_perspective_importance):
    alpha = float(user_perspective_importance)

    def kernel(len_ref,    # (TB, 1)        int32  history lengths
               hist_ref,   # (TB, N, F)     bf16   gathered history embeddings
               uhist_ref,  # (TB, F)        bf16   user-softmax history readout
               rhs_ref,    # (nT, 2*TI, F)  bf16   grid-invariant [itq ; items@W]
               ibias_ref,  # (1, TI)        f32    items @ fc_bias (this tile)
               out_ref):   # (TB, TI)       f32    probabilities
        TB, N, F = hist_ref.shape
        TI = out_ref.shape[1]
        it = pl.program_id(1)

        fused = rhs_ref[it]                        # (2*TI, F) bf16 (resident)
        hist2 = hist_ref[...].reshape(TB * N, F)   # layout-free (N % 16 == 0)

        # --- single fused MXU call: logits AND projected-history readout -----
        both = lax.dot_general(                    # (TB*N, 2*TI) f32
            hist2, fused, (((1,), (1,)), ((), ())),
            preferred_element_type=jnp.float32).reshape(TB, N, 2 * TI)
        item_att = both[:, :, :TI]                 # hist . item_queries
        hp = both[:, :, TI:]                       # hist . (items @ W)

        # --- mask history positions n >= length (same -inf mask as PyTorch).
        # NOTE: length == 0 yields NaN (all -inf softmax), exactly like the
        # PyTorch module; callers must supply length >= 1.
        pos = lax.broadcasted_iota(jnp.int32, (TB, N, 1), 1)
        lens = len_ref[...].reshape(TB, 1, 1)
        z = item_att + jnp.where(pos >= lens, -jnp.inf, 0.0)
        z = jnp.where(z >= 0, z, 0.2 * z)          # leaky_relu(0.2)

        # --- deferred softmax normalization (no item_scores materialized) ----
        m = jnp.max(z, axis=1, keepdims=True)      # (TB, 1, TI)
        e = jnp.exp(z - m)                         # (TB, N, TI)
        den = jnp.sum(e, axis=1)                   # (TB, TI)
        num = jnp.sum(e * hp, axis=1)              # (TB, TI)

        # --- hoisted user-perspective contribution: tiny MXU dot -------------
        user_part = lax.dot_general(               # (TB, TI)
            uhist_ref[...], fused[TI:, :], (((1,), (1,)), ((), ())),
            preferred_element_type=jnp.float32)

        # exact reciprocal: runs once per output element, essentially free.
        out_ref[...] = ((1.0 - alpha) * num * pl.reciprocal(den, approx=False)
                        + alpha * user_part + ibias_ref[...])

    return kernel


# ---------------------------------------------------------------------------
# wrapper: padding, precomputation, pallas_call
# ---------------------------------------------------------------------------
def personalized_probability_pallas(batch_user_id,
                                    users_history_items,
                                    items_embedding,
                                    user_embedding,
                                    fc_weight,
                                    fc_bias,
                                    user_perspective_importance,
                                    *,
                                    batch_tile=8,     # raise to 16 for big B
                                    item_tile=128):   # keep 128 on v5e / long N
    items_embedding = jnp.asarray(items_embedding, jnp.float32)   # (I, F)
    user_embedding = jnp.asarray(user_embedding, jnp.float32)     # (1, F)
    fc_weight = jnp.asarray(fc_weight, jnp.float32)               # (F, F)
    fc_bias = jnp.asarray(fc_bias, jnp.float32)                   # (F,)
    num_items, emb_dim = items_embedding.shape
    alpha = float(user_perspective_importance)

    # ---- host-side data-dependent history padding (mirrors the PyTorch loop)
    lengths, ids = pad_users_history_items(batch_user_id, users_history_items)
    B, n_hist = ids.shape
    # PyTorch's items_embedding[-1] (the -1 pad id) wraps to the last item row.
    ids_wrapped = np.where(ids < 0, ids + num_items, ids)

    # ---- hoist fc_projection out of the kernel (batch-invariant precompute)
    items_proj = jnp.dot(items_embedding, fc_weight, precision="highest")  # (I, F)
    items_bias = jnp.dot(items_embedding, fc_bias, precision="highest")    # (I,)

    # ---- pad batch / items to TPU-friendly tiles (lane-dense (TB, TI) output)
    TB, TI = batch_tile, item_tile
    B_pad = _round_up(max(B, 1), TB)
    I_pad = _round_up(num_items, TI)
    nT = I_pad // TI

    lengths_pad = np.ones((B_pad, 1), np.int32)     # pad rows: length 1 (no NaN)
    lengths_pad[:B, 0] = lengths
    ids_pad = np.zeros((B_pad, n_hist), np.int32)
    ids_pad[:B] = ids_wrapped

    # TODO(synk): for large B*N, gather history rows inside the kernel (resident
    # bf16 items table + scalar-prefetched id blocks) instead of materializing
    # the duplicated (B, N, F) history tensor in HBM, and chunk the history axis
    # N flash-style when TB*N*TI*4B exceeds the per-generation VMEM budget.
    hist_bf16 = items_embedding[jnp.asarray(ids_pad)].astype(jnp.bfloat16)

    def pad_rows(x, rows):
        return jnp.pad(x, ((0, rows - x.shape[0]),) + ((0, 0),) * (x.ndim - 1))

    # fused per-tile RHS: rows [0:TI) = item queries, rows [TI:2TI) = items @ W
    itq_pad = pad_rows(items_embedding, I_pad)                     # (I_pad, F)
    iproj_pad = pad_rows(items_proj, I_pad)                        # (I_pad, F)
    fused_rhs = jnp.concatenate(
        [itq_pad.reshape(nT, TI, emb_dim), iproj_pad.reshape(nT, TI, emb_dim)],
        axis=1).astype(jnp.bfloat16)                               # (nT, 2TI, F)
    ibias_f32 = jnp.pad(items_bias, (0, I_pad - num_items)).reshape(1, I_pad)
    lengths_dev = jnp.asarray(lengths_pad)                         # (B_pad, 1)

    # ---- user-perspective branch hoisted out of the kernel (item-invariant) --
    hist_f32 = hist_bf16.astype(jnp.float32)
    user_f32 = user_embedding.astype(jnp.bfloat16)[0].astype(jnp.float32)
    user_att = jnp.einsum('bnf,f->bn', hist_f32, user_f32,
                          precision="highest")                     # (B_pad, N)
    umask = jnp.where(jnp.arange(n_hist)[None, :] >= lengths_dev, -jnp.inf, 0.0)
    uz = user_att + umask
    uz = jnp.where(uz >= 0, uz, 0.2 * uz)                          # leaky_relu
    user_scores = jax.nn.softmax(uz, axis=-1)                      # (B_pad, N)
    uhist_bf16 = jnp.einsum('bn,bnf->bf', user_scores, hist_f32,
                            precision="highest").astype(jnp.bfloat16)

    kernel = _make_kernel(alpha)
    grid = (B_pad // TB, nT)

    grid_spec = pltpu.PrefetchScalarGridSpec(
        num_scalar_prefetch=0,
        grid=grid,
        in_specs=[
            pl.BlockSpec((TB, 1), lambda b, i: (b, 0)),                   # lengths
            pl.BlockSpec((TB, n_hist, emb_dim), lambda b, i: (b, 0, 0)),  # hist
            pl.BlockSpec((TB, emb_dim), lambda b, i: (b, 0)),             # uhist
            # grid-invariant fused item table: DMA'd once per launch
            pl.BlockSpec((nT, 2 * TI, emb_dim), lambda b, i: (0, 0, 0)),
            pl.BlockSpec((1, TI), lambda b, i: (0, i)),                   # items @ b
        ],
        out_specs=pl.BlockSpec((TB, TI), lambda b, i: (b, i)),
    )

    out_pad = pl.pallas_call(
        kernel,
        out_shape=jax.ShapeDtypeStruct((B_pad, I_pad), jnp.float32),
        grid_spec=grid_spec,
        compiler_params=pltpu.CompilerParams(
            # batch axis megacore-sharded; item axis sequential so the
            # (TB, N, F) hist block is revisit-skipped and never duplicated
            # across TensorCores on v7x.
            dimension_semantics=("parallel", "arbitrary"),
            # below v7x's 64 MiB physical VMEM, ample for TB=8 / TI=128 tiles.
            vmem_limit_bytes=48 * 1024 * 1024),
    )(lengths_dev, hist_bf16, uhist_bf16, fused_rhs, ibias_f32)

    return out_pad[:B, :num_items]


# ---------------------------------------------------------------------------
# pure-JAX reference (PyTorch-ordered math; mirrors the kernel's bf16 rounding)
# ---------------------------------------------------------------------------
def reference_forward(batch_user_id, users_history_items, items_embedding,
                      user_embedding, fc_weight, fc_bias, alpha):
    items_embedding = jnp.asarray(items_embedding, jnp.float32)
    user_embedding = jnp.asarray(user_embedding, jnp.float32)
    fc_weight = jnp.asarray(fc_weight, jnp.float32)
    fc_bias = jnp.asarray(fc_bias, jnp.float32)
    num_items = items_embedding.shape[0]

    lengths, ids = pad_users_history_items(batch_user_id, users_history_items)
    ids_wrapped = np.where(ids < 0, ids + num_items, ids)
    hist = items_embedding[jnp.asarray(ids_wrapped)]               # (B, N, F)

    rnd = lambda x: x.astype(jnp.bfloat16).astype(jnp.float32)
    hist_r = rnd(hist)
    itq_r = rnd(items_embedding)
    iproj_r = rnd(jnp.dot(items_embedding, fc_weight, precision="highest"))
    user_r = rnd(user_embedding)
    ibias = jnp.dot(items_embedding, fc_bias, precision="highest")

    B, N, F = hist_r.shape
    lens = jnp.asarray(lengths)
    mask = jnp.where(jnp.arange(N)[None, :] >= lens[:, None], -jnp.inf, 0.0)
    lrelu = lambda x: jnp.where(x >= 0, x, 0.2 * x)

    item_att = jnp.einsum('bnf,if->bni', hist_r, itq_r, precision="highest")
    item_scores = jax.nn.softmax(lrelu(item_att + mask[:, :, None]), axis=1)
    hp = jnp.einsum('bnf,if->bni', hist_r, iproj_r, precision="highest")
    item_read = jnp.sum(item_scores * hp, axis=1)                  # (B, I)

    user_att = jnp.einsum('bnf,f->bn', hist_r, user_r[0], precision="highest")
    user_scores = jax.nn.softmax(lrelu(user_att + mask), axis=-1)
    uhist = rnd(jnp.einsum('bn,bnf->bf', user_scores, hist_r,
                           precision="highest"))
    user_part = jnp.einsum('bf,if->bi', uhist, iproj_r, precision="highest")

    # fc_projection + readout in hoisted form (exact algebraic identity):
    return (1.0 - alpha) * item_read + alpha * user_part + ibias[None, :]


if __name__ == "__main__":
    num_users = 6
    num_items = 16
    emb_dim = 32
    batch_size = 4
    user_perspective_importance = 0.3

    key = jax.random.PRNGKey(0)
    k1, k2, k3, k4, k5 = jax.random.split(key, 5)

    items_embedding = jax.random.normal(k1, (num_items, emb_dim), jnp.float32)
    user_embedding = jax.random.normal(k2, (1, emb_dim), jnp.float32)
    fc_weight = jax.random.normal(k3, (emb_dim, emb_dim), jnp.float32) * 0.1
    fc_bias = jax.random.normal(k4, (emb_dim,), jnp.float32) * 0.1

    users_history_items = np.array(
        jax.random.randint(k5, (num_users, num_items), 0, 3), dtype=np.int64)
    # avoid empty histories (an all-masked softmax is NaN in PyTorch as well)
    users_history_items[:, 0] = np.maximum(users_history_items[:, 0], 1)

    batch_user_id = np.array([0, 2, 3, 5], dtype=np.int32)

    out = personalized_probability_pallas(
        batch_user_id, users_history_items,
        items_embedding, user_embedding, fc_weight, fc_bias,
        user_perspective_importance)
    out = jax.block_until_ready(out)
    assert out.shape == (batch_size, num_items)

    ref = jax.block_until_ready(reference_forward(
        batch_user_id, users_history_items,
        items_embedding, user_embedding, fc_weight, fc_bias,
        user_perspective_importance))

    # bf16 MXU operands => relaxed tolerance (reciprocal is now exact)
    assert np.allclose(np.asarray(out), np.asarray(ref), rtol=1e-2, atol=1e-2), \
        "Pallas kernel mismatch vs reference"

    print("KERNEL_OK")
</pallas_src>

<mosaic_0001>
module attributes {stable_mosaic.version = 11 : i64} {
  func.func @kernel(%arg0: i32, %arg1: i32, %arg2: memref<8x1xi32, #tpu.memory_space<vmem>>, %arg3: memref<8x32x32xbf16, #tpu.memory_space<vmem>>, %arg4: memref<8x32xbf16, #tpu.memory_space<vmem>>, %arg5: memref<1x256x32xbf16, #tpu.memory_space<vmem>>, %arg6: memref<1x128xf32, #tpu.memory_space<vmem>>, %arg7: memref<8x128xf32, #tpu.memory_space<vmem>>) attributes {dimension_semantics = [#tpu.dimension_semantics<parallel>, #tpu.dimension_semantics<arbitrary>], iteration_bounds = array<i64: 1, 1>, scalar_prefetch = 0 : i64, scratch_operands = 0 : i64, tpu.core_type = #tpu.core_type<tc>, window_params = [{transform_indices = @transform_0, window_bounds = array<i64: 8, 1>}, {transform_indices = @transform_1, window_bounds = array<i64: 8, 32, 32>}, {transform_indices = @transform_2, window_bounds = array<i64: 8, 32>}, {pipeline_mode = #tpu.pipeline_mode<synchronous>, transform_indices = @transform_3, window_bounds = array<i64: 1, 256, 32>}, {transform_indices = @transform_4, window_bounds = array<i64: 1, 128>}, {transform_indices = @transform_5, window_bounds = array<i64: 8, 128>}]} {
    %0 = arith.index_cast %arg1 : i32 to index
    %c0 = arith.constant 0 : index
    %c0_0 = arith.constant 0 : index
    %1 = vector.load %arg5[%0, %c0, %c0_0] : memref<1x256x32xbf16, #tpu.memory_space<vmem>>, vector<1x256x32xbf16>
    %2 = vector.shape_cast %1 : vector<1x256x32xbf16> to vector<256x32xbf16>
    %c0_1 = arith.constant 0 : index
    %c0_2 = arith.constant 0 : index
    %c0_3 = arith.constant 0 : index
    %3 = vector.load %arg3[%c0_1, %c0_2, %c0_3] : memref<8x32x32xbf16, #tpu.memory_space<vmem>>, vector<8x32x32xbf16>
    %4 = vector.shape_cast %3 : vector<8x32x32xbf16> to vector<256x32xbf16>
    %cst = arith.constant dense<0.000000e+00> : vector<256x256xf32>
    %5 = tpu.matmul %4, %2, %cst {dimension_numbers = #tpu.dot_dimension_numbers<[1], [1], [0], [0], [0, 0, 1, 0], [], []>} : vector<256x32xbf16>, vector<256x32xbf16>, vector<256x256xf32> -> vector<256x256xf32>
    %6 = vector.shape_cast %5 : vector<256x256xf32> to vector<8x32x256xf32>
    %7 = vector.extract_strided_slice %6 {offsets = [0, 0, 0], sizes = [8, 32, 128], strides = [1, 1, 1]} : vector<8x32x256xf32> to vector<8x32x128xf32>
    %8 = vector.extract_strided_slice %6 {offsets = [0, 0, 128], sizes = [8, 32, 128], strides = [1, 1, 1]} : vector<8x32x256xf32> to vector<8x32x128xf32>
    %9 = tpu.iota {dimensions = array<i32: 1>} : vector<8x32x1xi32>
    %c0_4 = arith.constant 0 : index
    %c0_5 = arith.constant 0 : index
    %10 = vector.load %arg2[%c0_4, %c0_5] : memref<8x1xi32, #tpu.memory_space<vmem>>, vector<8x1xi32>
    %11 = vector.shape_cast %10 : vector<8x1xi32> to vector<8x1x1xi32>
    %12 = vector.broadcast %11 : vector<8x1x1xi32> to vector<8x32x1xi32>
    %13 = arith.cmpi sge, %9, %12 : vector<8x32x1xi32>
    %cst_6 = arith.constant 0xFF800000 : f32
    %cst_7 = arith.constant 0.000000e+00 : f32
    %14 = vector.broadcast %cst_6 : f32 to vector<8x32x1xf32>
    %15 = vector.broadcast %cst_7 : f32 to vector<8x32x1xf32>
    %16 = arith.select %13, %14, %15 : vector<8x32x1xi1>, vector<8x32x1xf32>
    %17 = vector.broadcast %16 : vector<8x32x1xf32> to vector<8x32x128xf32>
    %18 = arith.addf %7, %17 : vector<8x32x128xf32>
    %cst_8 = arith.constant 0.000000e+00 : f32
    %19 = vector.broadcast %cst_8 : f32 to vector<8x32x128xf32>
    %20 = arith.cmpf oge, %18, %19 : vector<8x32x128xf32>
    %cst_9 = arith.constant 2.000000e-01 : f32
    %21 = vector.broadcast %cst_9 : f32 to vector<8x32x128xf32>
    %22 = arith.mulf %21, %18 : vector<8x32x128xf32>
    %23 = arith.select %20, %18, %22 : vector<8x32x128xi1>, vector<8x32x128xf32>
    %cst_10 = arith.constant dense<0xFF800000> : vector<8x128xf32>
    %24 = vector.multi_reduction <maximumf>, %23, %cst_10 [1] : vector<8x32x128xf32> to vector<8x128xf32>
    %25 = vector.shape_cast %24 : vector<8x128xf32> to vector<8x1x128xf32>
    %26 = vector.broadcast %25 : vector<8x1x128xf32> to vector<8x32x128xf32>
    %27 = arith.subf %23, %26 : vector<8x32x128xf32>
    %28 = math.exp %27 : vector<8x32x128xf32>
    %cst_11 = arith.constant dense<0.000000e+00> : vector<8x128xf32>
    %29 = vector.multi_reduction <add>, %28, %cst_11 [1] : vector<8x32x128xf32> to vector<8x128xf32>
    %30 = arith.mulf %28, %8 : vector<8x32x128xf32>
    %cst_12 = arith.constant dense<0.000000e+00> : vector<8x128xf32>
    %31 = vector.multi_reduction <add>, %30, %cst_12 [1] : vector<8x32x128xf32> to vector<8x128xf32>
    %c0_13 = arith.constant 0 : index
    %c0_14 = arith.constant 0 : index
    %32 = vector.load %arg4[%c0_13, %c0_14] : memref<8x32xbf16, #tpu.memory_space<vmem>>, vector<8x32xbf16>
    %33 = vector.extract_strided_slice %2 {offsets = [128, 0], sizes = [128, 32], strides = [1, 1]} : vector<256x32xbf16> to vector<128x32xbf16>
    %cst_15 = arith.constant dense<0.000000e+00> : vector<8x128xf32>
    %34 = tpu.matmul %32, %33, %cst_15 {dimension_numbers = #tpu.dot_dimension_numbers<[1], [1], [0], [0], [0, 0, 1, 0], [], []>} : vector<8x32xbf16>, vector<128x32xbf16>, vector<8x128xf32> -> vector<8x128xf32>
    %cst_16 = arith.constant 0.699999988 : f32
    %35 = vector.broadcast %cst_16 : f32 to vector<8x128xf32>
    %36 = arith.mulf %35, %31 : vector<8x128xf32>
    %37 = tpu.reciprocal %29 : vector<8x128xf32> -> vector<8x128xf32>
    %38 = arith.mulf %36, %37 : vector<8x128xf32>
    %cst_17 = arith.constant 3.000000e-01 : f32
    %39 = vector.broadcast %cst_17 : f32 to vector<8x128xf32>
    %40 = arith.mulf %39, %34 : vector<8x128xf32>
    %41 = arith.addf %38, %40 : vector<8x128xf32>
    %c0_18 = arith.constant 0 : index
    %c0_19 = arith.constant 0 : index
    %42 = vector.load %arg6[%c0_18, %c0_19] : memref<1x128xf32, #tpu.memory_space<vmem>>, vector<1x128xf32>
    %43 = vector.broadcast %42 : vector<1x128xf32> to vector<8x128xf32>
    %44 = arith.addf %41, %43 : vector<8x128xf32>
    %c0_20 = arith.constant 0 : index
    %c0_21 = arith.constant 0 : index
    %45 = vector.load %arg7[%c0_20, %c0_21] : memref<8x128xf32, #tpu.memory_space<vmem>>, vector<8x128xf32>
    tpu.vector_store %arg7[%c0_20, %c0_21], %44 {strides = array<i32>} : memref<8x128xf32, #tpu.memory_space<vmem>>, vector<8x128xf32>,
    return
  }
  func.func @transform_0(%arg0: i32, %arg1: i32) -> (i32, i32) {
    %c0_i32 = arith.constant 0 : i32
    %c0_i32_0 = arith.constant 0 : i32
    return %arg0, %c0_i32 : i32, i32
  }
  func.func @transform_1(%arg0: i32, %arg1: i32) -> (i32, i32, i32) {
    %c0_i32 = arith.constant 0 : i32
    %c0_i32_0 = arith.constant 0 : i32
    %c0_i32_1 = arith.constant 0 : i32
    return %arg0, %c0_i32, %c0_i32_0 : i32, i32, i32
  }
  func.func @transform_2(%arg0: i32, %arg1: i32) -> (i32, i32) {
    %c0_i32 = arith.constant 0 : i32
    %c0_i32_0 = arith.constant 0 : i32
    return %arg0, %c0_i32 : i32, i32
  }
  func.func @transform_3(%arg0: i32, %arg1: i32) -> (i32, i32, i32) {
    %c0_i32 = arith.constant 0 : i32
    %c0_i32_0 = arith.constant 0 : i32
    %c0_i32_1 = arith.constant 0 : i32
    %c0_i32_2 = arith.constant 0 : i32
    return %c0_i32, %c0_i32_0, %c0_i32_1 : i32, i32, i32
  }
  func.func @transform_4(%arg0: i32, %arg1: i32) -> (i32, i32) {
    %c0_i32 = arith.constant 0 : i32
    %c0_i32_0 = arith.constant 0 : i32
    return %c0_i32, %arg1 : i32, i32
  }
  func.func @transform_5(%arg0: i32, %arg1: i32) -> (i32, i32) {
    %c0_i32 = arith.constant 0 : i32
    return %arg0, %arg1 : i32, i32
  }
}

</mosaic_0001>

<llo_original>
// kernel: tpu_custom_call.1
$region0: #{tpu_custom_call.1}
  #allocation0 [shape = 'u32[]', space=smem, size = 0x4, offset = 0x4, fixed_abs, tag = 'smem constant byte address 0x4 - core index']
  #allocation1 [shape = 'u32[144,128]{1,0:T(1,128)}', space=vmem, size = 0x12000, scoped, tag = 'internal scratch']
  %s0 = inlined_call_operand.vmem [shape: s32[8,1], index: 0, kind: input, shape index: {}]
  %s1 = inlined_call_operand.vmem [shape: bf16[8,32,32], index: 1, kind: input, shape index: {}]
  %s2 = inlined_call_operand.vmem [shape: bf16[8,32], index: 2, kind: input, shape index: {}]
  %s3 = inlined_call_operand.vmem [shape: bf16[1,256,32], index: 3, kind: input, shape index: {}]
  %s4 = inlined_call_operand.vmem [shape: f32[1,128], index: 4, kind: input, shape index: {}]
  %s5 = inlined_call_operand.hbm [shape: f32[8,128], index: 5, kind: output, shape index: {}]
  %s6 = sld [smem:[#allocation0]]
  $region30: #{tpu_custom_call.1} parent=0
    _
  %s8 = ssub.s32 1, %s6
  %s9 = scalar_select 0, %s8, %s6
  $region1: #{tpu_custom_call.1} parent=0
    #allocation2 [shape = 'u8[4096]{0}', space=vmem, size = 0x1000, scoped, tag = 'output window, operand 0, single buffered']
    #allocation3 [shape = 's32[1]{0}', space=sflag, size = 0x4, scoped, tag = 'scoped memory for tpu_custom_call.1']
    %10 = vsyncpa [#allocation3], 0
    // Predicated region
    $region2: #{tpu_custom_call.1} parent=1 // pred_check
      _
    $region3: #{tpu_custom_call.1} parent=1 // pred_check_branch
      %12 = sbr.rel (0) target = $region5
    $region4: #{tpu_custom_call.1} parent=1 // pred_region
      _
    $region5: #{tpu_custom_call.1} parent=1 // pred_fallthru
      _
    // Predicated region
    $region6: #{tpu_custom_call.1} parent=1 // pred_check
      _
    $region7: #{tpu_custom_call.1} parent=1 // pred_check_branch
      %14 = sbr.rel (0) target = $region9
    $region8: #{tpu_custom_call.1} parent=1 // pred_region
      _
    $region9: #{tpu_custom_call.1} parent=1 // pred_fallthru
      _
    // Predicated region
    $region10: #{tpu_custom_call.1} parent=1 // pred_check
      _
    $region11: #{tpu_custom_call.1} parent=1 // pred_check_branch
      %16 = sbr.rel (0) target = $region13
    $region12: #{tpu_custom_call.1} parent=1 // pred_region
      _
    $region13: #{tpu_custom_call.1} parent=1 // pred_fallthru
      _
    // Predicated region
    $region14: #{tpu_custom_call.1} parent=1 // pred_check
      _
    $region15: #{tpu_custom_call.1} parent=1 // pred_check_branch
      %18 = sbr.rel (0) target = $region17
    $region16: #{tpu_custom_call.1} parent=1 // pred_region
      _
    $region17: #{tpu_custom_call.1} parent=1 // pred_fallthru
      _
    // Predicated region
    $region18: #{tpu_custom_call.1} parent=1 // pred_check
      _
    $region19: #{tpu_custom_call.1} parent=1 // pred_check_branch
      %20 = sbr.rel (0) target = $region21
    $region20: #{tpu_custom_call.1} parent=1 // pred_region
      _
    $region21: #{tpu_custom_call.1} parent=1 // pred_fallthru
      _
    %s22 = smul.u32 0, 32
    %s23 = smul.addr %s22, 4
    %s24 = scalar_lea.vmem %s3, %s23
    %v25 = vld [vmem:[%s24] sm:$0xf]
    %v26 = vld [vmem:[%s24 + $0x4] sm:$0xf]
    %v27 = vld [vmem:[%s24 + $0x8] sm:$0xf]
    %v28 = vld [vmem:[%s24 + $0xc] sm:$0xf]
    %v29 = vld [vmem:[%s24 + $0x10] sm:$0xf]
    %v30 = vld [vmem:[%s24 + $0x14] sm:$0xf]
    %v31 = vld [vmem:[%s24 + $0x18] sm:$0xf]
    %v32 = vld [vmem:[%s24 + $0x1c] sm:$0xf]
    %v33 = vld [vmem:[%s24 + $0x20] sm:$0xf]
    %v34 = vld [vmem:[%s24 + $0x24] sm:$0xf]
    %v35 = vld [vmem:[%s24 + $0x28] sm:$0xf]
    %v36 = vld [vmem:[%s24 + $0x2c] sm:$0xf]
    %v37 = vld [vmem:[%s24 + $0x30] sm:$0xf]
    %v38 = vld [vmem:[%s24 + $0x34] sm:$0xf]
    %v39 = vld [vmem:[%s24 + $0x38] sm:$0xf]
    %v40 = vld [vmem:[%s24 + $0x3c] sm:$0xf]
    %v41 = vld [vmem:[%s24 + $0x40] sm:$0xf]
    %v42 = vld [vmem:[%s24 + $0x44] sm:$0xf]
    %v43 = vld [vmem:[%s24 + $0x48] sm:$0xf]
    %v44 = vld [vmem:[%s24 + $0x4c] sm:$0xf]
    %v45 = vld [vmem:[%s24 + $0x50] sm:$0xf]
    %v46 = vld [vmem:[%s24 + $0x54] sm:$0xf]
    %v47 = vld [vmem:[%s24 + $0x58] sm:$0xf]
    %v48 = vld [vmem:[%s24 + $0x5c] sm:$0xf]
    %v49 = vld [vmem:[%s24 + $0x60] sm:$0xf]
    %v50 = vld [vmem:[%s24 + $0x64] sm:$0xf]
    %v51 = vld [vmem:[%s24 + $0x68] sm:$0xf]
    %v52 = vld [vmem:[%s24 + $0x6c] sm:$0xf]
    %v53 = vld [vmem:[%s24 + $0x70] sm:$0xf]
    %v54 = vld [vmem:[%s24 + $0x74] sm:$0xf]
    %v55 = vld [vmem:[%s24 + $0x78] sm:$0xf]
    %v56 = vld [vmem:[%s24 + $0x7c] sm:$0xf]
    %v57 = vld [vmem:[%s1] sm:$0xf]
    %v58 = vld [vmem:[%s1 + $0x4] sm:$0xf]
    %v59 = vld [vmem:[%s1 + $0x8] sm:$0xf]
    %v60 = vld [vmem:[%s1 + $0xc] sm:$0xf]
    %v61 = vld [vmem:[%s1 + $0x10] sm:$0xf]
    %v62 = vld [vmem:[%s1 + $0x14] sm:$0xf]
    %v63 = vld [vmem:[%s1 + $0x18] sm:$0xf]
    %v64 = vld [vmem:[%s1 + $0x1c] sm:$0xf]
    %v65 = vld [vmem:[%s1 + $0x20] sm:$0xf]
    %v66 = vld [vmem:[%s1 + $0x24] sm:$0xf]
    %v67 = vld [vmem:[%s1 + $0x28] sm:$0xf]
    %v68 = vld [vmem:[%s1 + $0x2c] sm:$0xf]
    %v69 = vld [vmem:[%s1 + $0x30] sm:$0xf]
    %v70 = vld [vmem:[%s1 + $0x34] sm:$0xf]
    %v71 = vld [vmem:[%s1 + $0x38] sm:$0xf]
    %v72 = vld [vmem:[%s1 + $0x3c] sm:$0xf]
    %v73 = vld [vmem:[%s1 + $0x40] sm:$0xf]
    %v74 = vld [vmem:[%s1 + $0x44] sm:$0xf]
    %v75 = vld [vmem:[%s1 + $0x48] sm:$0xf]
    %v76 = vld [vmem:[%s1 + $0x4c] sm:$0xf]
    %v77 = vld [vmem:[%s1 + $0x50] sm:$0xf]
    %v78 = vld [vmem:[%s1 + $0x54] sm:$0xf]
    %v79 = vld [vmem:[%s1 + $0x58] sm:$0xf]
    %v80 = vld [vmem:[%s1 + $0x5c] sm:$0xf]
    %v81 = vld [vmem:[%s1 + $0x60] sm:$0xf]
    %v82 = vld [vmem:[%s1 + $0x64] sm:$0xf]
    %v83 = vld [vmem:[%s1 + $0x68] sm:$0xf]
    %v84 = vld [vmem:[%s1 + $0x6c] sm:$0xf]
    %v85 = vld [vmem:[%s1 + $0x70] sm:$0xf]
    %v86 = vld [vmem:[%s1 + $0x74] sm:$0xf]
    %v87 = vld [vmem:[%s1 + $0x78] sm:$0xf]
    %v88 = vld [vmem:[%s1 + $0x7c] sm:$0xf]
    %v121 = vunpack.c.l.b16 %v57
    %v122 = vunpack.c.l.b16 %v58
    %v123 = vunpack.c.l.b16 %v59
    %v124 = vunpack.c.l.b16 %v60
    %v125 = vunpack.c.l.b16 %v61
    %v126 = vunpack.c.l.b16 %v62
    %v127 = vunpack.c.l.b16 %v63
    %v128 = vunpack.c.l.b16 %v64
    %v129 = vunpack.c.l.b16 %v65
    %v130 = vunpack.c.l.b16 %v66
    %v131 = vunpack.c.l.b16 %v67
    %v132 = vunpack.c.l.b16 %v68
    %v133 = vunpack.c.l.b16 %v69
    %v134 = vunpack.c.l.b16 %v70
    %v135 = vunpack.c.l.b16 %v71
    %v136 = vunpack.c.l.b16 %v72
    %v137 = vunpack.c.l.b16 %v73
    %v138 = vunpack.c.l.b16 %v74
    %v139 = vunpack.c.l.b16 %v75
    %v140 = vunpack.c.l.b16 %v76
    %v141 = vunpack.c.l.b16 %v77
    %v142 = vunpack.c.l.b16 %v78
    %v143 = vunpack.c.l.b16 %v79
    %v144 = vunpack.c.l.b16 %v80
    %v145 = vunpack.c.l.b16 %v81
    %v146 = vunpack.c.l.b16 %v82
    %v147 = vunpack.c.l.b16 %v83
    %v148 = vunpack.c.l.b16 %v84
    %v149 = vunpack.c.l.b16 %v85
    %v150 = vunpack.c.l.b16 %v86
    %v151 = vunpack.c.l.b16 %v87
    %v152 = vunpack.c.l.b16 %v88
    %v153 = vpack.c.b16 %v122, %v121
    %v154 = vpack.c.b16 %v124, %v123
    %v155 = vpack.c.b16 %v126, %v125
    %v156 = vpack.c.b16 %v128, %v127
    %v157 = vpack.c.b16 %v130, %v129
    %v158 = vpack.c.b16 %v132, %v131
    %v159 = vpack.c.b16 %v134, %v133
    %v160 = vpack.c.b16 %v136, %v135
    %v161 = vpack.c.b16 %v138, %v137
    %v162 = vpack.c.b16 %v140, %v139
    %v163 = vpack.c.b16 %v142, %v141
    %v164 = vpack.c.b16 %v144, %v143
    %v165 = vpack.c.b16 %v146, %v145
    %v166 = vpack.c.b16 %v148, %v147
    %v167 = vpack.c.b16 %v150, %v149
    %v168 = vpack.c.b16 %v152, %v151
    %v201 = vunpack.c.l.b16 %v25
    %v202 = vunpack.c.l.b16 %v26
    %v203 = vunpack.c.l.b16 %v27
    %v204 = vunpack.c.l.b16 %v28
    %v205 = vunpack.c.l.b16 %v29
    %v206 = vunpack.c.l.b16 %v30
    %v207 = vunpack.c.l.b16 %v31
    %v208 = vunpack.c.l.b16 %v32
    %v209 = vunpack.c.l.b16 %v33
    %v210 = vunpack.c.l.b16 %v34
    %v211 = vunpack.c.l.b16 %v35
    %v212 = vunpack.c.l.b16 %v36
    %v213 = vunpack.c.l.b16 %v37
    %v214 = vunpack.c.l.b16 %v38
    %v215 = vunpack.c.l.b16 %v39
    %v216 = vunpack.c.l.b16 %v40
    %v217 = vunpack.c.l.b16 %v41
    %v218 = vunpack.c.l.b16 %v42
    %v219 = vunpack.c.l.b16 %v43
    %v220 = vunpack.c.l.b16 %v44
    %v221 = vunpack.c.l.b16 %v45
    %v222 = vunpack.c.l.b16 %v46
    %v223 = vunpack.c.l.b16 %v47
    %v224 = vunpack.c.l.b16 %v48
    %v225 = vunpack.c.l.b16 %v49
    %v226 = vunpack.c.l.b16 %v50
    %v227 = vunpack.c.l.b16 %v51
    %v228 = vunpack.c.l.b16 %v52
    %v229 = vunpack.c.l.b16 %v53
    %v230 = vunpack.c.l.b16 %v54
    %v231 = vunpack.c.l.b16 %v55
    %v232 = vunpack.c.l.b16 %v56
    %v233 = vpack.c.b16 %v202, %v201
    %v234 = vpack.c.b16 %v204, %v203
    %v235 = vpack.c.b16 %v206, %v205
    %v236 = vpack.c.b16 %v208, %v207
    %v237 = vpack.c.b16 %v210, %v209
    %v238 = vpack.c.b16 %v212, %v211
    %v239 = vpack.c.b16 %v214, %v213
    %v240 = vpack.c.b16 %v216, %v215
    %v241 = vpack.c.b16 %v218, %v217
    %v242 = vpack.c.b16 %v220, %v219
    %v243 = vpack.c.b16 %v222, %v221
    %v244 = vpack.c.b16 %v224, %v223
    %v245 = vpack.c.b16 %v226, %v225
    %v246 = vpack.c.b16 %v228, %v227
    %v247 = vpack.c.b16 %v230, %v229
    %v248 = vpack.c.b16 %v232, %v231
    %vm249 = vcmask 261120
    %v251 = vsel %vm249, %v153, 0
    %v254 = vsel %vm249, %v154, 0
    %v257 = vsel %vm249, %v155, 0
    %v260 = vsel %vm249, %v156, 0
    %v263 = vsel %vm249, %v157, 0
    %v266 = vsel %vm249, %v158, 0
    %v269 = vsel %vm249, %v159, 0
    %v272 = vsel %vm249, %v160, 0
    %v275 = vsel %vm249, %v161, 0
    %v278 = vsel %vm249, %v162, 0
    %v281 = vsel %vm249, %v163, 0
    %v284 = vsel %vm249, %v164, 0
    %v287 = vsel %vm249, %v165, 0
    %v290 = vsel %vm249, %v166, 0
    %v293 = vsel %vm249, %v167, 0
    %v296 = vsel %vm249, %v168, 0
    %v299 = vsel %vm249, %v233, 0
    %v302 = vsel %vm249, %v234, 0
    %v305 = vsel %vm249, %v235, 0
    %v308 = vsel %vm249, %v236, 0
    %v311 = vsel %vm249, %v237, 0
    %v314 = vsel %vm249, %v238, 0
    %v317 = vsel %vm249, %v239, 0
    %v320 = vsel %vm249, %v240, 0
    %v323 = vsel %vm249, %v241, 0
    %v326 = vsel %vm249, %v242, 0
    %v329 = vsel %vm249, %v243, 0
    %v332 = vsel %vm249, %v244, 0
    %v335 = vsel %vm249, %v245, 0
    %v338 = vsel %vm249, %v246, 0
    %v341 = vsel %vm249, %v247, 0
    %v344 = vsel %vm249, %v248, 0
    %346 = vmatprep.subr.bf16.mxu0 0
    %347 = vmatpush1.bf16.xpose.msra.mxu0 %v320
    %348 = vmatprep.subr.bf16.mxu0 0
    %349 = vmatpush1.bf16.xpose.msra.mxu0 %v317
    %350 = vmatprep.subr.bf16.mxu0 0
    %351 = vmatpush1.bf16.xpose.msra.mxu0 %v314
    %352 = vmatprep.subr.bf16.mxu0 0
    %353 = vmatpush1.bf16.xpose.msra.mxu0 %v311
    %354 = vmatprep.subr.bf16.mxu0 0
    %355 = vmatpush1.bf16.xpose.msra.mxu0 %v308
    %356 = vmatprep.subr.bf16.mxu0 0
    %357 = vmatpush1.bf16.xpose.msra.mxu0 %v305
    %358 = vmatprep.subr.bf16.mxu0 0
    %359 = vmatpush1.bf16.xpose.msra.mxu0 %v302
    %360 = vmatprep.subr.bf16.mxu0 0
    %361 = vmatpush1.bf16.xpose.msra.mxu0 %v299
    %362 = vmatprep.subr.bf16.mxu0 0
    %363 = vmatpush2.bf16.xpose.msra.mxu0 %v344
    %364 = vmatprep.subr.bf16.mxu0 0
    %365 = vmatpush2.bf16.xpose.msra.mxu0 %v341
    %366 = vmatprep.subr.bf16.mxu0 0
    %367 = vmatpush2.bf16.xpose.msra.mxu0 %v338
    %368 = vmatprep.subr.bf16.mxu0 0
    %369 = vmatpush2.bf16.xpose.msra.mxu0 %v335
    %370 = vmatprep.subr.bf16.mxu0 0
    %371 = vmatpush2.bf16.xpose.msra.mxu0 %v332
    %372 = vmatprep.subr.bf16.mxu0 0
    %373 = vmatpush2.bf16.xpose.msra.mxu0 %v329
    %374 = vmatprep.subr.bf16.mxu0 0
    %375 = vmatpush2.bf16.xpose.msra.mxu0 %v326
    %376 = vmatprep.subr.bf16.mxu0 0
    %377 = vmatpush2.bf16.xpose.msra.mxu0 %v323
    %378 = vmatprep.mubr.bf16.mxu0 0
    %379 = vmatmul.mubr.bf16.gmra.mxu0 %v251
    %v380 = vpop.f32.mrf.mxu0
    %v381 = vadd.f32 0.0, %v380
    %v382 = vpop.f32.mrf.mxu0
    %v383 = vadd.f32 0.0, %v382
    %v384 = vpop.f32.mrf.mxu0
    %v385 = vadd.f32 0.0, %v384
    %v386 = vpop.f32.mrf.mxu0
    %v387 = vadd.f32 0.0, %v386
    %388 = vmatprep.mubr.bf16.mxu0 0
    %389 = vmatmul.mubr.bf16.gmra.mxu0 %v254
    %v390 = vpop.f32.mrf.mxu0
    %v391 = vadd.f32 0.0, %v390
    %v392 = vpop.f32.mrf.mxu0
    %v393 = vadd.f32 0.0, %v392
    %v394 = vpop.f32.mrf.mxu0
    %v395 = vadd.f32 0.0, %v394
    %v396 = vpop.f32.mrf.mxu0
    %v397 = vadd.f32 0.0, %v396
    %398 = vmatprep.mubr.bf16.mxu0 0
    %399 = vmatmul.mubr.bf16.gmra.mxu0 %v257
    %v400 = vpop.f32.mrf.mxu0
    %v401 = vadd.f32 0.0, %v400
    %v402 = vpop.f32.mrf.mxu0
    %v403 = vadd.f32 0.0, %v402
    %v404 = vpop.f32.mrf.mxu0
    %v405 = vadd.f32 0.0, %v404
    %v406 = vpop.f32.mrf.mxu0
    %v407 = vadd.f32 0.0, %v406
    %408 = vmatprep.mubr.bf16.mxu0 0
    %409 = vmatmul.mubr.bf16.gmra.mxu0 %v260
    %v410 = vpop.f32.mrf.mxu0
    %v411 = vadd.f32 0.0, %v410
    %v412 = vpop.f32.mrf.mxu0
    %v413 = vadd.f32 0.0, %v412
    %v414 = vpop.f32.mrf.mxu0
    %v415 = vadd.f32 0.0, %v414
    %v416 = vpop.f32.mrf.mxu0
    %v417 = vadd.f32 0.0, %v416
    %418 = vmatprep.mubr.bf16.mxu0 0
    %419 = vmatmul.mubr.bf16.gmra.mxu0 %v263
    %v420 = vpop.f32.mrf.mxu0
    %v421 = vadd.f32 0.0, %v420
    %v422 = vpop.f32.mrf.mxu0
    %v423 = vadd.f32 0.0, %v422
    %v424 = vpop.f32.mrf.mxu0
    %v425 = vadd.f32 0.0, %v424
    %v426 = vpop.f32.mrf.mxu0
    %v427 = vadd.f32 0.0, %v426
    %428 = vmatprep.mubr.bf16.mxu0 0
    %429 = vmatmul.mubr.bf16.gmra.mxu0 %v266
    %v430 = vpop.f32.mrf.mxu0
    %v431 = vadd.f32 0.0, %v430
    %v432 = vpop.f32.mrf.mxu0
    %v433 = vadd.f32 0.0, %v432
    %v434 = vpop.f32.mrf.mxu0
    %v435 = vadd.f32 0.0, %v434
    %v436 = vpop.f32.mrf.mxu0
    %v437 = vadd.f32 0.0, %v436
    %438 = vmatprep.mubr.bf16.mxu0 0
    %439 = vmatmul.mubr.bf16.gmra.mxu0 %v269
    %v440 = vpop.f32.mrf.mxu0
    %v441 = vadd.f32 0.0, %v440
    %v442 = vpop.f32.mrf.mxu0
    %v443 = vadd.f32 0.0, %v442
    %v444 = vpop.f32.mrf.mxu0
    %v445 = vadd.f32 0.0, %v444
    %v446 = vpop.f32.mrf.mxu0
    %v447 = vadd.f32 0.0, %v446
    %448 = vmatprep.mubr.bf16.mxu0 0
    %449 = vmatmul.mubr.bf16.gmra.mxu0 %v272
    %v450 = vpop.f32.mrf.mxu0
    %v451 = vadd.f32 0.0, %v450
    %v452 = vpop.f32.mrf.mxu0
    %v453 = vadd.f32 0.0, %v452
    %v454 = vpop.f32.mrf.mxu0
    %v455 = vadd.f32 0.0, %v454
    %v456 = vpop.f32.mrf.mxu0
    %v457 = vadd.f32 0.0, %v456
    %458 = vmatprep.mubr.bf16.mxu0 0
    %459 = vmatmul.mubr.bf16.gmra.mxu0 %v275
    %v460 = vpop.f32.mrf.mxu0
    %v461 = vadd.f32 0.0, %v460
    %v462 = vpop.f32.mrf.mxu0
    %v463 = vadd.f32 0.0, %v462
    %v464 = vpop.f32.mrf.mxu0
    %v465 = vadd.f32 0.0, %v464
    %v466 = vpop.f32.mrf.mxu0
    %v467 = vadd.f32 0.0, %v466
    %468 = vmatprep.mubr.bf16.mxu0 0
    %469 = vmatmul.mubr.bf16.gmra.mxu0 %v278
    %v470 = vpop.f32.mrf.mxu0
    %v471 = vadd.f32 0.0, %v470
    %v472 = vpop.f32.mrf.mxu0
    %v473 = vadd.f32 0.0, %v472
    %v474 = vpop.f32.mrf.mxu0
    %v475 = vadd.f32 0.0, %v474
    %v476 = vpop.f32.mrf.mxu0
    %v477 = vadd.f32 0.0, %v476
    %478 = vmatprep.mubr.bf16.mxu0 0
    %479 = vmatmul.mubr.bf16.gmra.mxu0 %v281
    %v480 = vpop.f32.mrf.mxu0
    %v481 = vadd.f32 0.0, %v480
    %v482 = vpop.f32.mrf.mxu0
    %v483 = vadd.f32 0.0, %v482
    %v484 = vpop.f32.mrf.mxu0
    %v485 = vadd.f32 0.0, %v484
    %v486 = vpop.f32.mrf.mxu0
    %v487 = vadd.f32 0.0, %v486
    %488 = vmatprep.mubr.bf16.mxu0 0
    %489 = vmatmul.mubr.bf16.gmra.mxu0 %v284
    %v490 = vpop.f32.mrf.mxu0
    %v491 = vadd.f32 0.0, %v490
    %v492 = vpop.f32.mrf.mxu0
    %v493 = vadd.f32 0.0, %v492
    %v494 = vpop.f32.mrf.mxu0
    %v495 = vadd.f32 0.0, %v494
    %v496 = vpop.f32.mrf.mxu0
    %v497 = vadd.f32 0.0, %v496
    %498 = vmatprep.mubr.bf16.mxu0 0
    %499 = vmatmul.mubr.bf16.gmra.mxu0 %v287
    %v500 = vpop.f32.mrf.mxu0
    %v501 = vadd.f32 0.0, %v500
    %v502 = vpop.f32.mrf.mxu0
    %v503 = vadd.f32 0.0, %v502
    %v504 = vpop.f32.mrf.mxu0
    %v505 = vadd.f32 0.0, %v504
    %v506 = vpop.f32.mrf.mxu0
    %v507 = vadd.f32 0.0, %v506
    %508 = vmatprep.mubr.bf16.mxu0 0
    %509 = vmatmul.mubr.bf16.gmra.mxu0 %v290
    %v510 = vpop.f32.mrf.mxu0
    %v511 = vadd.f32 0.0, %v510
    %v512 = vpop.f32.mrf.mxu0
    %v513 = vadd.f32 0.0, %v512
    %v514 = vpop.f32.mrf.mxu0
    %v515 = vadd.f32 0.0, %v514
    %v516 = vpop.f32.mrf.mxu0
    %v517 = vadd.f32 0.0, %v516
    %518 = vmatprep.mubr.bf16.mxu0 0
    %519 = vmatmul.mubr.bf16.gmra.mxu0 %v293
    %v520 = vpop.f32.mrf.mxu0
    %v521 = vadd.f32 0.0, %v520
    %v522 = vpop.f32.mrf.mxu0
    %v523 = vadd.f32 0.0, %v522
    %v524 = vpop.f32.mrf.mxu0
    %v525 = vadd.f32 0.0, %v524
    %v526 = vpop.f32.mrf.mxu0
    %v527 = vadd.f32 0.0, %v526
    %528 = vmatprep.mubr.bf16.mxu0 0
    %529 = vmatmul.mubr.bf16.gmra.mxu0 %v296
    %v530 = vpop.f32.mrf.mxu0
    %v531 = vadd.f32 0.0, %v530
    %v532 = vpop.f32.mrf.mxu0
    %v533 = vadd.f32 0.0, %v532
    %v534 = vpop.f32.mrf.mxu0
    %v535 = vadd.f32 0.0, %v534
    %v536 = vpop.f32.mrf.mxu0
    %v537 = vadd.f32 0.0, %v536
    %538 = vdwg.mxu0
    %v539 = vlaneseq
    %v540 = vshrl.u32 %v539, 7
    %v541 = vadd.s32 %v540, 8
    %v542 = vadd.s32 %v540, 16
    %v543 = vadd.s32 %v540, 24
    %v544 = vld [vmem:[%s0] sm:$0xff]
    %v545 = vcombine.high %v544, %v544
    %v547 = vunpack.c.l.s4 1966171168
    %v548 = vunpack.c.0.s8 %v547
    %v549 = vlaneseq
    %v550 = vshrl.u32 %v549, 7
    %v551 = vsub.s32 %v548, %v550
    %v552 = vrot.slane %v544, %v551
    %v554 = vunpack.c.l.s4 1966171168
    %v555 = vunpack.c.0.s8 %v554
    %v556 = vlaneseq
    %v557 = vshrl.u32 %v556, 7
    %v558 = vsub.s32 %v555, %v557
    %v559 = vrot.slane %v545, %v558
    %v560 = vcombine.high %v552, %v552
    %v561 = vcombine.high %v559, %v559
    %v563 = vunpack.c.l.s4 1966171168
    %v564 = vunpack.c.0.s8 %v563
    %v565 = vlaneseq
    %v566 = vshrl.u32 %v565, 7
    %v567 = vsub.s32 %v564, %v566
    %v568 = vrot.slane %v552, %v567
    %v570 = vunpack.c.l.s4 1966171168
    %v571 = vunpack.c.0.s8 %v570
    %v572 = vlaneseq
    %v573 = vshrl.u32 %v572, 7
    %v574 = vsub.s32 %v571, %v573
    %v575 = vrot.slane %v559, %v574
    %v577 = vunpack.c.l.s4 1966171168
    %v578 = vunpack.c.0.s8 %v577
    %v579 = vlaneseq
    %v580 = vshrl.u32 %v579, 7
    %v581 = vsub.s32 %v578, %v580
    %v582 = vrot.slane %v560, %v581
    %v584 = vunpack.c.l.s4 1966171168
    %v585 = vunpack.c.0.s8 %v584
    %v586 = vlaneseq
    %v587 = vshrl.u32 %v586, 7
    %v588 = vsub.s32 %v585, %v587
    %v589 = vrot.slane %v561, %v588
    %v590 = vcombine.high %v568, %v568
    %v591 = vcombine.high %v575, %v575
    %v592 = vcombine.high %v582, %v582
    %v593 = vcombine.high %v589, %v589
    %v594 = vlaneseq
    %v595 = vshrl.u32 %v594, 7
    %v596 = vsub.s32 0, %v595
    %v597 = vrot.slane %v568, %v596
    %v598 = vlaneseq
    %v599 = vshrl.u32 %v598, 7
    %v600 = vsub.s32 0, %v599
    %v601 = vrot.slane %v582, %v600
    %v602 = vlaneseq
    %v603 = vshrl.u32 %v602, 7
    %v604 = vsub.s32 0, %v603
    %v605 = vrot.slane %v590, %v604
    %v606 = vlaneseq
    %v607 = vshrl.u32 %v606, 7
    %v608 = vsub.s32 0, %v607
    %v609 = vrot.slane %v592, %v608
    %v610 = vlaneseq
    %v611 = vshrl.u32 %v610, 7
    %v612 = vsub.s32 0, %v611
    %v613 = vrot.slane %v575, %v612
    %v614 = vlaneseq
    %v615 = vshrl.u32 %v614, 7
    %v616 = vsub.s32 0, %v615
    %v617 = vrot.slane %v589, %v616
    %v618 = vlaneseq
    %v619 = vshrl.u32 %v618, 7
    %v620 = vsub.s32 0, %v619
    %v621 = vrot.slane %v591, %v620
    %v622 = vlaneseq
    %v623 = vshrl.u32 %v622, 7
    %v624 = vsub.s32 0, %v623
    %v625 = vrot.slane %v593, %v624
    %vm626 = vcmp.ge.s32.totalorder %v540, %v597
    %vm627 = vcmp.ge.s32.totalorder %v541, %v597
    %vm628 = vcmp.ge.s32.totalorder %v542, %v597
    %vm629 = vcmp.ge.s32.totalorder %v543, %v597
    %vm630 = vcmp.ge.s32.totalorder %v540, %v601
    %vm631 = vcmp.ge.s32.totalorder %v541, %v601
    %vm632 = vcmp.ge.s32.totalorder %v542, %v601
    %vm633 = vcmp.ge.s32.totalorder %v543, %v601
    %vm634 = vcmp.ge.s32.totalorder %v540, %v605
    %vm635 = vcmp.ge.s32.totalorder %v541, %v605
    %vm636 = vcmp.ge.s32.totalorder %v542, %v605
    %vm637 = vcmp.ge.s32.totalorder %v543, %v605
    %vm638 = vcmp.ge.s32.totalorder %v540, %v609
    %vm639 = vcmp.ge.s32.totalorder %v541, %v609
    %vm640 = vcmp.ge.s32.totalorder %v542, %v609
    %vm641 = vcmp.ge.s32.totalorder %v543, %v609
    %vm642 = vcmp.ge.s32.totalorder %v540, %v613
    %vm643 = vcmp.ge.s32.totalorder %v541, %v613
    %vm644 = vcmp.ge.s32.totalorder %v542, %v613
    %vm645 = vcmp.ge.s32.totalorder %v543, %v613
    %vm646 = vcmp.ge.s32.totalorder %v540, %v617
    %vm647 = vcmp.ge.s32.totalorder %v541, %v617
    %vm648 = vcmp.ge.s32.totalorder %v542, %v617
    %vm649 = vcmp.ge.s32.totalorder %v543, %v617
    %vm650 = vcmp.ge.s32.totalorder %v540, %v621
    %vm651 = vcmp.ge.s32.totalorder %v541, %v621
    %vm652 = vcmp.ge.s32.totalorder %v542, %v621
    %vm653 = vcmp.ge.s32.totalorder %v543, %v621
    %vm654 = vcmp.ge.s32.totalorder %v540, %v625
    %vm655 = vcmp.ge.s32.totalorder %v541, %v625
    %vm656 = vcmp.ge.s32.totalorder %v542, %v625
    %vm657 = vcmp.ge.s32.totalorder %v543, %v625
    %v658 = vsel %vm626, -inf, 0.0
    %v659 = vsel %vm627, -inf, 0.0
    %v660 = vsel %vm628, -inf, 0.0
    %v661 = vsel %vm629, -inf, 0.0
    %v662 = vsel %vm630, -inf, 0.0
    %v663 = vsel %vm631, -inf, 0.0
    %v664 = vsel %vm632, -inf, 0.0
    %v665 = vsel %vm633, -inf, 0.0
    %v666 = vsel %vm634, -inf, 0.0
    %v667 = vsel %vm635, -inf, 0.0
    %v668 = vsel %vm636, -inf, 0.0
    %v669 = vsel %vm637, -inf, 0.0
    %v670 = vsel %vm638, -inf, 0.0
    %v671 = vsel %vm639, -inf, 0.0
    %v672 = vsel %vm640, -inf, 0.0
    %v673 = vsel %vm641, -inf, 0.0
    %v674 = vsel %vm642, -inf, 0.0
    %v675 = vsel %vm643, -inf, 0.0
    %v676 = vsel %vm644, -inf, 0.0
    %v677 = vsel %vm645, -inf, 0.0
    %v678 = vsel %vm646, -inf, 0.0
    %v679 = vsel %vm647, -inf, 0.0
    %v680 = vsel %vm648, -inf, 0.0
    %v681 = vsel %vm649, -inf, 0.0
    %v682 = vsel %vm650, -inf, 0.0
    %v683 = vsel %vm651, -inf, 0.0
    %v684 = vsel %vm652, -inf, 0.0
    %v685 = vsel %vm653, -inf, 0.0
    %v686 = vsel %vm654, -inf, 0.0
    %v687 = vsel %vm655, -inf, 0.0
    %v688 = vsel %vm656, -inf, 0.0
    %v689 = vsel %vm657, -inf, 0.0
    %691 = vset.pattern.permute.xlu0 0
    %692 = vperm.xlu0 %691, %v658
    %v693 = vpop.permute.xlu0 %692
    %696 = vset.pattern.permute.xlu0 0
    %697 = vperm.xlu0 %696, %v659
    %v698 = vpop.permute.xlu0 %697
    %701 = vset.pattern.permute.xlu0 0
    %702 = vperm.xlu0 %701, %v660
    %v703 = vpop.permute.xlu0 %702
    %706 = vset.pattern.permute.xlu0 0
    %707 = vperm.xlu0 %706, %v661
    %v708 = vpop.permute.xlu0 %707
    %711 = vset.pattern.permute.xlu0 0
    %712 = vperm.xlu0 %711, %v662
    %v713 = vpop.permute.xlu0 %712
    %716 = vset.pattern.permute.xlu0 0
    %717 = vperm.xlu0 %716, %v663
    %v718 = vpop.permute.xlu0 %717
    %721 = vset.pattern.permute.xlu0 0
    %722 = vperm.xlu0 %721, %v664
    %v723 = vpop.permute.xlu0 %722
    %726 = vset.pattern.permute.xlu0 0
    %727 = vperm.xlu0 %726, %v665
    %v728 = vpop.permute.xlu0 %727
    %731 = vset.pattern.permute.xlu0 0
    %732 = vperm.xlu0 %731, %v666
    %v733 = vpop.permute.xlu0 %732
    %736 = vset.pattern.permute.xlu0 0
    %737 = vperm.xlu0 %736, %v667
    %v738 = vpop.permute.xlu0 %737
    %741 = vset.pattern.permute.xlu0 0
    %742 = vperm.xlu0 %741, %v668
    %v743 = vpop.permute.xlu0 %742
    %746 = vset.pattern.permute.xlu0 0
    %747 = vperm.xlu0 %746, %v669
    %v748 = vpop.permute.xlu0 %747
    %751 = vset.pattern.permute.xlu0 0
    %752 = vperm.xlu0 %751, %v670
    %v753 = vpop.permute.xlu0 %752
    %756 = vset.pattern.permute.xlu0 0
    %757 = vperm.xlu0 %756, %v671
    %v758 = vpop.permute.xlu0 %757
    %761 = vset.pattern.permute.xlu0 0
    %762 = vperm.xlu0 %761, %v672
    %v763 = vpop.permute.xlu0 %762
    %766 = vset.pattern.permute.xlu0 0
    %767 = vperm.xlu0 %766, %v673
    %v768 = vpop.permute.xlu0 %767
    %771 = vset.pattern.permute.xlu0 0
    %772 = vperm.xlu0 %771, %v674
    %v773 = vpop.permute.xlu0 %772
    %776 = vset.pattern.permute.xlu0 0
    %777 = vperm.xlu0 %776, %v675
    %v778 = vpop.permute.xlu0 %777
    %781 = vset.pattern.permute.xlu0 0
    %782 = vperm.xlu0 %781, %v676
    %v783 = vpop.permute.xlu0 %782
    %786 = vset.pattern.permute.xlu0 0
    %787 = vperm.xlu0 %786, %v677
    %v788 = vpop.permute.xlu0 %787
    %791 = vset.pattern.permute.xlu0 0
    %792 = vperm.xlu0 %791, %v678
    %v793 = vpop.permute.xlu0 %792
    %796 = vset.pattern.permute.xlu0 0
    %797 = vperm.xlu0 %796, %v679
    %v798 = vpop.permute.xlu0 %797
    %801 = vset.pattern.permute.xlu0 0
    %802 = vperm.xlu0 %801, %v680
    %v803 = vpop.permute.xlu0 %802
    %806 = vset.pattern.permute.xlu0 0
    %807 = vperm.xlu0 %806, %v681
    %v808 = vpop.permute.xlu0 %807
    %811 = vset.pattern.permute.xlu0 0
    %812 = vperm.xlu0 %811, %v682
    %v813 = vpop.permute.xlu0 %812
    %816 = vset.pattern.permute.xlu0 0
    %817 = vperm.xlu0 %816, %v683
    %v818 = vpop.permute.xlu0 %817
    %821 = vset.pattern.permute.xlu0 0
    %822 = vperm.xlu0 %821, %v684
    %v823 = vpop.permute.xlu0 %822
    %826 = vset.pattern.permute.xlu0 0
    %827 = vperm.xlu0 %826, %v685
    %v828 = vpop.permute.xlu0 %827
    %831 = vset.pattern.permute.xlu0 0
    %832 = vperm.xlu0 %831, %v686
    %v833 = vpop.permute.xlu0 %832
    %836 = vset.pattern.permute.xlu0 0
    %837 = vperm.xlu0 %836, %v687
    %v838 = vpop.permute.xlu0 %837
    %841 = vset.pattern.permute.xlu0 0
    %842 = vperm.xlu0 %841, %v688
    %v843 = vpop.permute.xlu0 %842
    %846 = vset.pattern.permute.xlu0 0
    %847 = vperm.xlu0 %846, %v689
    %v848 = vpop.permute.xlu0 %847
    %v850 = vadd.f32 %v381, %v693
    %v851 = vadd.f32 %v385, %v698
    %v852 = vadd.f32 %v391, %v703
    %v853 = vadd.f32 %v395, %v708
    %v854 = vadd.f32 %v401, %v713
    %v855 = vadd.f32 %v405, %v718
    %v856 = vadd.f32 %v411, %v723
    %v857 = vadd.f32 %v415, %v728
    %v858 = vadd.f32 %v421, %v733
    %v859 = vadd.f32 %v425, %v738
    %v860 = vadd.f32 %v431, %v743
    %v861 = vadd.f32 %v435, %v748
    %v862 = vadd.f32 %v441, %v753
    %v863 = vadd.f32 %v445, %v758
    %v864 = vadd.f32 %v451, %v763
    %v865 = vadd.f32 %v455, %v768
    %v866 = vadd.f32 %v461, %v773
    %v867 = vadd.f32 %v465, %v778
    %v868 = vadd.f32 %v471, %v783
    %v869 = vadd.f32 %v475, %v788
    %v870 = vadd.f32 %v481, %v793
    %v871 = vadd.f32 %v485, %v798
    %v872 = vadd.f32 %v491, %v803
    %v873 = vadd.f32 %v495, %v808
    %v874 = vadd.f32 %v501, %v813
    %v875 = vadd.f32 %v505, %v818
    %v876 = vadd.f32 %v511, %v823
    %v877 = vadd.f32 %v515, %v828
    %v878 = vadd.f32 %v521, %v833
    %v879 = vadd.f32 %v525, %v838
    %v880 = vadd.f32 %v531, %v843
    %v881 = vadd.f32 %v535, %v848
    %vm882 = vcmp.ge.f32.partialorder %v850, 0.0
    %vm883 = vcmp.ge.f32.partialorder %v851, 0.0
    %vm884 = vcmp.ge.f32.partialorder %v852, 0.0
    %vm885 = vcmp.ge.f32.partialorder %v853, 0.0
    %vm886 = vcmp.ge.f32.partialorder %v854, 0.0
    %vm887 = vcmp.ge.f32.partialorder %v855, 0.0
    %vm888 = vcmp.ge.f32.partialorder %v856, 0.0
    %vm889 = vcmp.ge.f32.partialorder %v857, 0.0
    %vm890 = vcmp.ge.f32.partialorder %v858, 0.0
    %vm891 = vcmp.ge.f32.partialorder %v859, 0.0
    %vm892 = vcmp.ge.f32.partialorder %v860, 0.0
    %vm893 = vcmp.ge.f32.partialorder %v861, 0.0
    %vm894 = vcmp.ge.f32.partialorder %v862, 0.0
    %vm895 = vcmp.ge.f32.partialorder %v863, 0.0
    %vm896 = vcmp.ge.f32.partialorder %v864, 0.0
    %vm897 = vcmp.ge.f32.partialorder %v865, 0.0
    %vm898 = vcmp.ge.f32.partialorder %v866, 0.0
    %vm899 = vcmp.ge.f32.partialorder %v867, 0.0
    %vm900 = vcmp.ge.f32.partialorder %v868, 0.0
    %vm901 = vcmp.ge.f32.partialorder %v869, 0.0
    %vm902 = vcmp.ge.f32.partialorder %v870, 0.0
    %vm903 = vcmp.ge.f32.partialorder %v871, 0.0
    %vm904 = vcmp.ge.f32.partialorder %v872, 0.0
    %vm905 = vcmp.ge.f32.partialorder %v873, 0.0
    %vm906 = vcmp.ge.f32.partialorder %v874, 0.0
    %vm907 = vcmp.ge.f32.partialorder %v875, 0.0
    %vm908 = vcmp.ge.f32.partialorder %v876, 0.0
    %vm909 = vcmp.ge.f32.partialorder %v877, 0.0
    %vm910 = vcmp.ge.f32.partialorder %v878, 0.0
    %vm911 = vcmp.ge.f32.partialorder %v879, 0.0
    %vm912 = vcmp.ge.f32.partialorder %v880, 0.0
    %vm913 = vcmp.ge.f32.partialorder %v881, 0.0
    %v914 = vmul.f32 %v850, 0.2
    %v915 = vmul.f32 %v851, 0.2
    %v916 = vmul.f32 %v852, 0.2
    %v917 = vmul.f32 %v853, 0.2
    %v918 = vmul.f32 %v854, 0.2
    %v919 = vmul.f32 %v855, 0.2
    %v920 = vmul.f32 %v856, 0.2
    %v921 = vmul.f32 %v857, 0.2
    %v922 = vmul.f32 %v858, 0.2
    %v923 = vmul.f32 %v859, 0.2
    %v924 = vmul.f32 %v860, 0.2
    %v925 = vmul.f32 %v861, 0.2
    %v926 = vmul.f32 %v862, 0.2
    %v927 = vmul.f32 %v863, 0.2
    %v928 = vmul.f32 %v864, 0.2
    %v929 = vmul.f32 %v865, 0.2
    %v930 = vmul.f32 %v866, 0.2
    %v931 = vmul.f32 %v867, 0.2
    %v932 = vmul.f32 %v868, 0.2
    %v933 = vmul.f32 %v869, 0.2
    %v934 = vmul.f32 %v870, 0.2
    %v935 = vmul.f32 %v871, 0.2
    %v936 = vmul.f32 %v872, 0.2
    %v937 = vmul.f32 %v873, 0.2
    %v938 = vmul.f32 %v874, 0.2
    %v939 = vmul.f32 %v875, 0.2
    %v940 = vmul.f32 %v876, 0.2
    %v941 = vmul.f32 %v877, 0.2
    %v942 = vmul.f32 %v878, 0.2
    %v943 = vmul.f32 %v879, 0.2
    %v944 = vmul.f32 %v880, 0.2
    %v945 = vmul.f32 %v881, 0.2
    %v946 = vsel %vm882, %v850, %v914
    %v947 = vsel %vm883, %v851, %v915
    %v948 = vsel %vm884, %v852, %v916
    %v949 = vsel %vm885, %v853, %v917
    %v950 = vsel %vm886, %v854, %v918
    %v951 = vsel %vm887, %v855, %v919
    %v952 = vsel %vm888, %v856, %v920
    %v953 = vsel %vm889, %v857, %v921
    %v954 = vsel %vm890, %v858, %v922
    %v955 = vsel %vm891, %v859, %v923
    %v956 = vsel %vm892, %v860, %v924
    %v957 = vsel %vm893, %v861, %v925
    %v958 = vsel %vm894, %v862, %v926
    %v959 = vsel %vm895, %v863, %v927
    %v960 = vsel %vm896, %v864, %v928
    %v961 = vsel %vm897, %v865, %v929
    %v962 = vsel %vm898, %v866, %v930
    %v963 = vsel %vm899, %v867, %v931
    %v964 = vsel %vm900, %v868, %v932
    %v965 = vsel %vm901, %v869, %v933
    %v966 = vsel %vm902, %v870, %v934
    %v967 = vsel %vm903, %v871, %v935
    %v968 = vsel %vm904, %v872, %v936
    %v969 = vsel %vm905, %v873, %v937
    %v970 = vsel %vm906, %v874, %v938
    %v971 = vsel %vm907, %v875, %v939
    %v972 = vsel %vm908, %v876, %v940
    %v973 = vsel %vm909, %v877, %v941
    %v974 = vsel %vm910, %v878, %v942
    %v975 = vsel %vm911, %v879, %v943
    %v976 = vsel %vm912, %v880, %v944
    %v977 = vsel %vm913, %v881, %v945
    %v978 = vmax.f32 %v946, %v947
    %v979 = vmax.f32 %v978, %v948
    %v980 = vmax.f32 %v979, %v949
    %v981 = vrot.slane %v980, 4
    %v982 = vmax.f32 %v980, %v981
    %v983 = vrot.slane %v982, 2
    %v984 = vmax.f32 %v982, %v983
    %v985 = vrot.slane %v984, 1
    %v986 = vmax.f32 %v984, %v985
    %v987 = vmax.f32 %v950, %v951
    %v988 = vmax.f32 %v987, %v952
    %v989 = vmax.f32 %v988, %v953
    %v990 = vrot.slane %v989, 4
    %v991 = vmax.f32 %v989, %v990
    %v992 = vrot.slane %v991, 2
    %v993 = vmax.f32 %v991, %v992
    %v994 = vrot.slane %v993, 1
    %v995 = vmax.f32 %v993, %v994
    %v996 = vmax.f32 %v954, %v955
    %v997 = vmax.f32 %v996, %v956
    %v998 = vmax.f32 %v997, %v957
    %v999 = vrot.slane %v998, 4
    %v1000 = vmax.f32 %v998, %v999
    %v1001 = vrot.slane %v1000, 2
    %v1002 = vmax.f32 %v1000, %v1001
    %v1003 = vrot.slane %v1002, 1
    %v1004 = vmax.f32 %v1002, %v1003
    %v1005 = vmax.f32 %v958, %v959
    %v1006 = vmax.f32 %v1005, %v960
    %v1007 = vmax.f32 %v1006, %v961
    %v1008 = vrot.slane %v1007, 4
    %v1009 = vmax.f32 %v1007, %v1008
    %v1010 = vrot.slane %v1009, 2
    %v1011 = vmax.f32 %v1009, %v1010
    %v1012 = vrot.slane %v1011, 1
    %v1013 = vmax.f32 %v1011, %v1012
    %v1014 = vmax.f32 %v962, %v963
    %v1015 = vmax.f32 %v1014, %v964
    %v1016 = vmax.f32 %v1015, %v965
    %v1017 = vrot.slane %v1016, 4
    %v1018 = vmax.f32 %v1016, %v1017
    %v1019 = vrot.slane %v1018, 2
    %v1020 = vmax.f32 %v1018, %v1019
    %v1021 = vrot.slane %v1020, 1
    %v1022 = vmax.f32 %v1020, %v1021
    %v1023 = vmax.f32 %v966, %v967
    %v1024 = vmax.f32 %v1023, %v968
    %v1025 = vmax.f32 %v1024, %v969
    %v1026 = vrot.slane %v1025, 4
    %v1027 = vmax.f32 %v1025, %v1026
    %v1028 = vrot.slane %v1027, 2
    %v1029 = vmax.f32 %v1027, %v1028
    %v1030 = vrot.slane %v1029, 1
    %v1031 = vmax.f32 %v1029, %v1030
    %v1032 = vmax.f32 %v970, %v971
    %v1033 = vmax.f32 %v1032, %v972
    %v1034 = vmax.f32 %v1033, %v973
    %v1035 = vrot.slane %v1034, 4
    %v1036 = vmax.f32 %v1034, %v1035
    %v1037 = vrot.slane %v1036, 2
    %v1038 = vmax.f32 %v1036, %v1037
    %v1039 = vrot.slane %v1038, 1
    %v1040 = vmax.f32 %v1038, %v1039
    %v1041 = vmax.f32 %v974, %v975
    %v1042 = vmax.f32 %v1041, %v976
    %v1043 = vmax.f32 %v1042, %v977
    %v1044 = vrot.slane %v1043, 4
    %v1045 = vmax.f32 %v1043, %v1044
    %v1046 = vrot.slane %v1045, 2
    %v1047 = vmax.f32 %v1045, %v1046
    %v1048 = vrot.slane %v1047, 1
    %v1049 = vmax.f32 %v1047, %v1048
    %v1050 = vsub.f32 %v946, %v986
    %v1051 = vsub.f32 %v947, %v986
    %v1052 = vsub.f32 %v948, %v986
    %v1053 = vsub.f32 %v949, %v986
    %v1054 = vsub.f32 %v950, %v995
    %v1055 = vsub.f32 %v951, %v995
    %v1056 = vsub.f32 %v952, %v995
    %v1057 = vsub.f32 %v953, %v995
    %v1058 = vsub.f32 %v954, %v1004
    %v1059 = vsub.f32 %v955, %v1004
    %v1060 = vsub.f32 %v956, %v1004
    %v1061 = vsub.f32 %v957, %v1004
    %v1062 = vsub.f32 %v958, %v1013
    %v1063 = vsub.f32 %v959, %v1013
    %v1064 = vsub.f32 %v960, %v1013
    %v1065 = vsub.f32 %v961, %v1013
    %v1066 = vsub.f32 %v962, %v1022
    %v1067 = vsub.f32 %v963, %v1022
    %v1068 = vsub.f32 %v964, %v1022
    %v1069 = vsub.f32 %v965, %v1022
    %v1070 = vsub.f32 %v966, %v1031
    %v1071 = vsub.f32 %v967, %v1031
    %v1072 = vsub.f32 %v968, %v1031
    %v1073 = vsub.f32 %v969, %v1031
    %v1074 = vsub.f32 %v970, %v1040
    %v1075 = vsub.f32 %v971, %v1040
    %v1076 = vsub.f32 %v972, %v1040
    %v1077 = vsub.f32 %v973, %v1040
    %v1078 = vsub.f32 %v974, %v1049
    %v1079 = vsub.f32 %v975, %v1049
    %v1080 = vsub.f32 %v976, %v1049
    %v1081 = vsub.f32 %v977, %v1049
    %v1082 = vmul.f32 %v1050, 1.442695
    %v1083 = vpow.pop %v1082
    %v1084 = vmul.f32 %v1051, 1.442695
    %v1085 = vpow.pop %v1084
    %v1086 = vmul.f32 %v1052, 1.442695
    %v1087 = vpow.pop %v1086
    %v1088 = vmul.f32 %v1053, 1.442695
    %v1089 = vpow.pop %v1088
    %v1090 = vmul.f32 %v1054, 1.442695
    %v1091 = vpow.pop %v1090
    %v1092 = vmul.f32 %v1055, 1.442695
    %v1093 = vpow.pop %v1092
    %v1094 = vmul.f32 %v1056, 1.442695
    %v1095 = vpow.pop %v1094
    %v1096 = vmul.f32 %v1057, 1.442695
    %v1097 = vpow.pop %v1096
    %v1098 = vmul.f32 %v1058, 1.442695
    %v1099 = vpow.pop %v1098
    %v1100 = vmul.f32 %v1059, 1.442695
    %v1101 = vpow.pop %v1100
    %v1102 = vmul.f32 %v1060, 1.442695
    %v1103 = vpow.pop %v1102
    %v1104 = vmul.f32 %v1061, 1.442695
    %v1105 = vpow.pop %v1104
    %v1106 = vmul.f32 %v1062, 1.442695
    %v1107 = vpow.pop %v1106
    %v1108 = vmul.f32 %v1063, 1.442695
    %v1109 = vpow.pop %v1108
    %v1110 = vmul.f32 %v1064, 1.442695
    %v1111 = vpow.pop %v1110
    %v1112 = vmul.f32 %v1065, 1.442695
    %v1113 = vpow.pop %v1112
    %v1114 = vmul.f32 %v1066, 1.442695
    %v1115 = vpow.pop %v1114
    %v1116 = vmul.f32 %v1067, 1.442695
    %v1117 = vpow.pop %v1116
    %v1118 = vmul.f32 %v1068, 1.442695
    %v1119 = vpow.pop %v1118
    %v1120 = vmul.f32 %v1069, 1.442695
    %v1121 = vpow.pop %v1120
    %v1122 = vmul.f32 %v1070, 1.442695
    %v1123 = vpow.pop %v1122
    %v1124 = vmul.f32 %v1071, 1.442695
    %v1125 = vpow.pop %v1124
    %v1126 = vmul.f32 %v1072, 1.442695
    %v1127 = vpow.pop %v1126
    %v1128 = vmul.f32 %v1073, 1.442695
    %v1129 = vpow.pop %v1128
    %v1130 = vmul.f32 %v1074, 1.442695
    %v1131 = vpow.pop %v1130
    %v1132 = vmul.f32 %v1075, 1.442695
    %v1133 = vpow.pop %v1132
    %v1134 = vmul.f32 %v1076, 1.442695
    %v1135 = vpow.pop %v1134
    %v1136 = vmul.f32 %v1077, 1.442695
    %v1137 = vpow.pop %v1136
    %v1138 = vmul.f32 %v1078, 1.442695
    %v1139 = vpow.pop %v1138
    %v1140 = vmul.f32 %v1079, 1.442695
    %v1141 = vpow.pop %v1140
    %v1142 = vmul.f32 %v1080, 1.442695
    %v1143 = vpow.pop %v1142
    %v1144 = vmul.f32 %v1081, 1.442695
    %v1145 = vpow.pop %v1144
    %v1146 = vadd.f32 %v1083, %v1085
    %v1147 = vadd.f32 %v1146, %v1087
    %v1148 = vadd.f32 %v1147, %v1089
    %v1149 = vrot.slane %v1148, 4
    %v1150 = vadd.f32 %v1148, %v1149
    %v1151 = vrot.slane %v1150, 2
    %v1152 = vadd.f32 %v1150, %v1151
    %v1153 = vrot.slane %v1152, 1
    %v1154 = vadd.f32 %v1152, %v1153
    %v1155 = vadd.f32 %v1091, %v1093
    %v1156 = vadd.f32 %v1155, %v1095
    %v1157 = vadd.f32 %v1156, %v1097
    %v1158 = vrot.slane %v1157, 4
    %v1159 = vadd.f32 %v1157, %v1158
    %v1160 = vrot.slane %v1159, 2
    %v1161 = vadd.f32 %v1159, %v1160
    %v1162 = vrot.slane %v1161, 1
    %v1163 = vadd.f32 %v1161, %v1162
    %v1164 = vadd.f32 %v1099, %v1101
    %v1165 = vadd.f32 %v1164, %v1103
    %v1166 = vadd.f32 %v1165, %v1105
    %v1167 = vrot.slane %v1166, 4
    %v1168 = vadd.f32 %v1166, %v1167
    %v1169 = vrot.slane %v1168, 2
    %v1170 = vadd.f32 %v1168, %v1169
    %v1171 = vrot.slane %v1170, 1
    %v1172 = vadd.f32 %v1170, %v1171
    %v1173 = vadd.f32 %v1107, %v1109
    %v1174 = vadd.f32 %v1173, %v1111
    %v1175 = vadd.f32 %v1174, %v1113
    %v1176 = vrot.slane %v1175, 4
    %v1177 = vadd.f32 %v1175, %v1176
    %v1178 = vrot.slane %v1177, 2
    %v1179 = vadd.f32 %v1177, %v1178
    %v1180 = vrot.slane %v1179, 1
    %v1181 = vadd.f32 %v1179, %v1180
    %v1182 = vadd.f32 %v1115, %v1117
    %v1183 = vadd.f32 %v1182, %v1119
    %v1184 = vadd.f32 %v1183, %v1121
    %v1185 = vrot.slane %v1184, 4
    %v1186 = vadd.f32 %v1184, %v1185
    %v1187 = vrot.slane %v1186, 2
    %v1188 = vadd.f32 %v1186, %v1187
    %v1189 = vrot.slane %v1188, 1
    %v1190 = vadd.f32 %v1188, %v1189
    %v1191 = vadd.f32 %v1123, %v1125
    %v1192 = vadd.f32 %v1191, %v1127
    %v1193 = vadd.f32 %v1192, %v1129
    %v1194 = vrot.slane %v1193, 4
    %v1195 = vadd.f32 %v1193, %v1194
    %v1196 = vrot.slane %v1195, 2
    %v1197 = vadd.f32 %v1195, %v1196
    %v1198 = vrot.slane %v1197, 1
    %v1199 = vadd.f32 %v1197, %v1198
    %v1200 = vadd.f32 %v1131, %v1133
    %v1201 = vadd.f32 %v1200, %v1135
    %v1202 = vadd.f32 %v1201, %v1137
    %v1203 = vrot.slane %v1202, 4
    %v1204 = vadd.f32 %v1202, %v1203
    %v1205 = vrot.slane %v1204, 2
    %v1206 = vadd.f32 %v1204, %v1205
    %v1207 = vrot.slane %v1206, 1
    %v1208 = vadd.f32 %v1206, %v1207
    %v1209 = vadd.f32 %v1139, %v1141
    %v1210 = vadd.f32 %v1209, %v1143
    %v1211 = vadd.f32 %v1210, %v1145
    %v1212 = vrot.slane %v1211, 4
    %v1213 = vadd.f32 %v1211, %v1212
    %v1214 = vrot.slane %v1213, 2
    %v1215 = vadd.f32 %v1213, %v1214
    %v1216 = vrot.slane %v1215, 1
    %v1217 = vadd.f32 %v1215, %v1216
    %v1218 = vmul.f32 %v1083, %v383
    %v1219 = vmul.f32 %v1085, %v387
    %v1220 = vmul.f32 %v1087, %v393
    %v1221 = vmul.f32 %v1089, %v397
    %v1222 = vmul.f32 %v1091, %v403
    %v1223 = vmul.f32 %v1093, %v407
    %v1224 = vmul.f32 %v1095, %v413
    %v1225 = vmul.f32 %v1097, %v417
    %v1226 = vmul.f32 %v1099, %v423
    %v1227 = vmul.f32 %v1101, %v427
    %v1228 = vmul.f32 %v1103, %v433
    %v1229 = vmul.f32 %v1105, %v437
    %v1230 = vmul.f32 %v1107, %v443
    %v1231 = vmul.f32 %v1109, %v447
    %v1232 = vmul.f32 %v1111, %v453
    %v1233 = vmul.f32 %v1113, %v457
    %v1234 = vmul.f32 %v1115, %v463
    %v1235 = vmul.f32 %v1117, %v467
    %v1236 = vmul.f32 %v1119, %v473
    %v1237 = vmul.f32 %v1121, %v477
    %v1238 = vmul.f32 %v1123, %v483
    %v1239 = vmul.f32 %v1125, %v487
    %v1240 = vmul.f32 %v1127, %v493
    %v1241 = vmul.f32 %v1129, %v497
    %v1242 = vmul.f32 %v1131, %v503
    %v1243 = vmul.f32 %v1133, %v507
    %v1244 = vmul.f32 %v1135, %v513
    %v1245 = vmul.f32 %v1137, %v517
    %v1246 = vmul.f32 %v1139, %v523
    %v1247 = vmul.f32 %v1141, %v527
    %v1248 = vmul.f32 %v1143, %v533
    %v1249 = vmul.f32 %v1145, %v537
    %v1250 = vadd.f32 %v1218, %v1219
    %v1251 = vadd.f32 %v1250, %v1220
    %v1252 = vadd.f32 %v1251, %v1221
    %v1253 = vrot.slane %v1252, 4
    %v1254 = vadd.f32 %v1252, %v1253
    %v1255 = vrot.slane %v1254, 2
    %v1256 = vadd.f32 %v1254, %v1255
    %v1257 = vrot.slane %v1256, 1
    %v1258 = vadd.f32 %v1256, %v1257
    %v1259 = vadd.f32 %v1222, %v1223
    %v1260 = vadd.f32 %v1259, %v1224
    %v1261 = vadd.f32 %v1260, %v1225
    %v1262 = vrot.slane %v1261, 4
    %v1263 = vadd.f32 %v1261, %v1262
    %v1264 = vrot.slane %v1263, 2
    %v1265 = vadd.f32 %v1263, %v1264
    %v1266 = vrot.slane %v1265, 1
    %v1267 = vadd.f32 %v1265, %v1266
    %v1268 = vadd.f32 %v1226, %v1227
    %v1269 = vadd.f32 %v1268, %v1228
    %v1270 = vadd.f32 %v1269, %v1229
    %v1271 = vrot.slane %v1270, 4
    %v1272 = vadd.f32 %v1270, %v1271
    %v1273 = vrot.slane %v1272, 2
    %v1274 = vadd.f32 %v1272, %v1273
    %v1275 = vrot.slane %v1274, 1
    %v1276 = vadd.f32 %v1274, %v1275
    %v1277 = vadd.f32 %v1230, %v1231
    %v1278 = vadd.f32 %v1277, %v1232
    %v1279 = vadd.f32 %v1278, %v1233
    %v1280 = vrot.slane %v1279, 4
    %v1281 = vadd.f32 %v1279, %v1280
    %v1282 = vrot.slane %v1281, 2
    %v1283 = vadd.f32 %v1281, %v1282
    %v1284 = vrot.slane %v1283, 1
    %v1285 = vadd.f32 %v1283, %v1284
    %v1286 = vadd.f32 %v1234, %v1235
    %v1287 = vadd.f32 %v1286, %v1236
    %v1288 = vadd.f32 %v1287, %v1237
    %v1289 = vrot.slane %v1288, 4
    %v1290 = vadd.f32 %v1288, %v1289
    %v1291 = vrot.slane %v1290, 2
    %v1292 = vadd.f32 %v1290, %v1291
    %v1293 = vrot.slane %v1292, 1
    %v1294 = vadd.f32 %v1292, %v1293
    %v1295 = vadd.f32 %v1238, %v1239
    %v1296 = vadd.f32 %v1295, %v1240
    %v1297 = vadd.f32 %v1296, %v1241
    %v1298 = vrot.slane %v1297, 4
    %v1299 = vadd.f32 %v1297, %v1298
    %v1300 = vrot.slane %v1299, 2
    %v1301 = vadd.f32 %v1299, %v1300
    %v1302 = vrot.slane %v1301, 1
    %v1303 = vadd.f32 %v1301, %v1302
    %v1304 = vadd.f32 %v1242, %v1243
    %v1305 = vadd.f32 %v1304, %v1244
    %v1306 = vadd.f32 %v1305, %v1245
    %v1307 = vrot.slane %v1306, 4
    %v1308 = vadd.f32 %v1306, %v1307
    %v1309 = vrot.slane %v1308, 2
    %v1310 = vadd.f32 %v1308, %v1309
    %v1311 = vrot.slane %v1310, 1
    %v1312 = vadd.f32 %v1310, %v1311
    %v1313 = vadd.f32 %v1246, %v1247
    %v1314 = vadd.f32 %v1313, %v1248
    %v1315 = vadd.f32 %v1314, %v1249
    %v1316 = vrot.slane %v1315, 4
    %v1317 = vadd.f32 %v1315, %v1316
    %v1318 = vrot.slane %v1317, 2
    %v1319 = vadd.f32 %v1317, %v1318
    %v1320 = vrot.slane %v1319, 1
    %v1321 = vadd.f32 %v1319, %v1320
    %v1322 = vld [vmem:[%s2] sm:$0xf]
    %v1324 = vsel %vm249, %v1322, 0
    %1326 = vmatprep.subr.bf16.mxu0 0
    %1327 = vmatpush1.bf16.xpose.msra.mxu0 %v344
    %1328 = vmatprep.subr.bf16.mxu0 0
    %1329 = vmatpush1.bf16.xpose.msra.mxu0 %v341
    %1330 = vmatprep.subr.bf16.mxu0 0
    %1331 = vmatpush1.bf16.xpose.msra.mxu0 %v338
    %1332 = vmatprep.subr.bf16.mxu0 0
    %1333 = vmatpush1.bf16.xpose.msra.mxu0 %v335
    %1334 = vmatprep.subr.bf16.mxu0 0
    %1335 = vmatpush1.bf16.xpose.msra.mxu0 %v332
    %1336 = vmatprep.subr.bf16.mxu0 0
    %1337 = vmatpush1.bf16.xpose.msra.mxu0 %v329
    %1338 = vmatprep.subr.bf16.mxu0 0
    %1339 = vmatpush1.bf16.xpose.msra.mxu0 %v326
    %1340 = vmatprep.subr.bf16.mxu0 0
    %1341 = vmatpush1.bf16.xpose.msra.mxu0 %v323
    %1342 = vmatprep.subr.bf16.mxu0 0
    %1343 = vmatpush2.bf16.xpose.msra.mxu0 0
    %1344 = vmatprep.subr.bf16.mxu0 0
    %1345 = vmatpush2.bf16.xpose.msra.mxu0 0
    %1346 = vmatprep.subr.bf16.mxu0 0
    %1347 = vmatpush2.bf16.xpose.msra.mxu0 0
    %1348 = vmatprep.subr.bf16.mxu0 0
    %1349 = vmatpush2.bf16.xpose.msra.mxu0 0
    %1350 = vmatprep.subr.bf16.mxu0 0
    %1351 = vmatpush2.bf16.xpose.msra.mxu0 0
    %1352 = vmatprep.subr.bf16.mxu0 0
    %1353 = vmatpush2.bf16.xpose.msra.mxu0 0
    %1354 = vmatprep.subr.bf16.mxu0 0
    %1355 = vmatpush2.bf16.xpose.msra.mxu0 0
    %1356 = vmatprep.subr.bf16.mxu0 0
    %1357 = vmatpush2.bf16.xpose.msra.mxu0 0
    %1358 = vmatprep.mubr.bf16.mxu0 0
    %1359 = vmatmul.mubr.bf16.gmra.mxu0 %v1324
    %v1360 = vpop.f32.mrf.mxu0
    %v1361 = vadd.f32 0.0, %v1360
    %v1362 = vpop.f32.mrf.mxu0
    %v1363 = vpop.f32.mrf.mxu0
    %v1364 = vpop.f32.mrf.mxu0
    %1365 = vdwg.mxu0
    %v1366 = vmul.f32 %v1258, 0.7
    %v1367 = vmul.f32 %v1267, 0.7
    %v1368 = vmul.f32 %v1276, 0.7
    %v1369 = vmul.f32 %v1285, 0.7
    %v1370 = vmul.f32 %v1294, 0.7
    %v1371 = vmul.f32 %v1303, 0.7
    %v1372 = vmul.f32 %v1312, 0.7
    %v1373 = vmul.f32 %v1321, 0.7
    %v1374 = vrcp.pop %v1154
    %v1375 = vrcp.pop %v1163
    %v1376 = vrcp.pop %v1172
    %v1377 = vrcp.pop %v1181
    %v1378 = vrcp.pop %v1190
    %v1379 = vrcp.pop %v1199
    %v1380 = vrcp.pop %v1208
    %v1381 = vrcp.pop %v1217
    %v1382 = vmul.f32 %v1366, %v1374
    %v1383 = vmul.f32 %v1367, %v1375
    %v1384 = vmul.f32 %v1368, %v1376
    %v1385 = vmul.f32 %v1369, %v1377
    %v1386 = vmul.f32 %v1370, %v1378
    %v1387 = vmul.f32 %v1371, %v1379
    %v1388 = vmul.f32 %v1372, %v1380
    %v1389 = vmul.f32 %v1373, %v1381
    %v1390 = vmul.f32 %v1361, 0.3
    %v1392 = vrot.slane %v1390, 1
    %v1393 = vrot.slane %v1390, 2
    %v1394 = vrot.slane %v1390, 3
    %v1395 = vrot.slane %v1390, 4
    %v1396 = vrot.slane %v1390, 5
    %v1397 = vrot.slane %v1390, 6
    %v1398 = vrot.slane %v1390, 7
    %v1407 = vadd.f32 %v1382, %v1390
    %v1408 = vadd.f32 %v1383, %v1392
    %v1409 = vadd.f32 %v1384, %v1393
    %v1410 = vadd.f32 %v1385, %v1394
    %v1411 = vadd.f32 %v1386, %v1395
    %v1412 = vadd.f32 %v1387, %v1396
    %v1413 = vadd.f32 %v1388, %v1397
    %v1414 = vadd.f32 %v1389, %v1398
    %v1415 = vld [vmem:[%s4] sm:$0x1]
    %v1417 = vlaneseq
    %v1418 = vshrl.u32 %v1417, 7
    %v1419 = vsub.s32 0, %v1418
    %v1420 = vrot.slane %v1415, %v1419
    %v1422 = vadd.f32 %v1407, %v1420
    %v1423 = vadd.f32 %v1408, %v1420
    %v1424 = vadd.f32 %v1409, %v1420
    %v1425 = vadd.f32 %v1410, %v1420
    %v1426 = vadd.f32 %v1411, %v1420
    %v1427 = vadd.f32 %v1412, %v1420
    %v1428 = vadd.f32 %v1413, %v1420
    %v1429 = vadd.f32 %v1414, %v1420
    %v1438 = vrot.slane %v1423, 7
    %vm1439 = vcmask 1041409
    %v1440 = vsel %vm1439, %v1438, %v1422
    %v1441 = vrot.slane %v1424, 6
    %vm1442 = vcmask 1042434
    %v1443 = vsel %vm1442, %v1441, %v1440
    %v1444 = vrot.slane %v1425, 5
    %vm1445 = vcmask 1043459
    %v1446 = vsel %vm1445, %v1444, %v1443
    %v1447 = vrot.slane %v1426, 4
    %vm1448 = vcmask 1044484
    %v1449 = vsel %vm1448, %v1447, %v1446
    %v1450 = vrot.slane %v1427, 3
    %vm1451 = vcmask 1045509
    %v1452 = vsel %vm1451, %v1450, %v1449
    %v1453 = vrot.slane %v1428, 2
    %vm1454 = vcmask 1046534
    %v1455 = vsel %vm1454, %v1453, %v1452
    %v1456 = vrot.slane %v1429, 1
    %vm1457 = vcmask 1047559
    %v1458 = vsel %vm1457, %v1456, %v1455
    %1460 = vst [vmem:[#allocation2] sm:$0xff] %v1458
    // Predicated region
    $region22: #{tpu_custom_call.1} parent=1 // pred_check
      _
    $region23: #{tpu_custom_call.1} parent=1 // pred_check_branch
      %1462 = sbr.rel (0) target = $region25
    $region24: #{tpu_custom_call.1} parent=1 // pred_region
      %s1464 = ssub.s32 128, 128
      %1465 = vsyncadd [#allocation3], %s1464
      %s1467 = sshll.u32 [#allocation2], 4
      %s1468 = int_to_ptr.vmem [resolvable:$true] %s1467
      %1470 = dma.vmem_to_hbm [thread:$0]  %s1468, 128, %s5, [#allocation3]
    $region25: #{tpu_custom_call.1} parent=1 // pred_fallthru
      _
    // Predicated region
    $region26: #{tpu_custom_call.1} parent=1 // pred_check
      _
    $region27: #{tpu_custom_call.1} parent=1 // pred_check_branch
      %1472 = sbr.rel (0) target = $region29
    $region28: #{tpu_custom_call.1} parent=1 // pred_region
      %1473 = dma.done [#allocation3], 128
    $region29: #{tpu_custom_call.1} parent=1 // pred_fallthru
      _
    %1474 = vsyncpa [#allocation3], 1

</llo_original>
